<compile_context>
chip_gen: v7x
topology: tpu7x:2x2x1
jax: 0.10.0
libtpu: 0.0.40
codegen_flags: <defaults>
</compile_context>

<pallas_src>
import jax
import jax.numpy as jnp
from jax.experimental import pallas as pl
from jax.experimental.pallas import tpu as pltpu

M = 30.0  # temperature from the PyTorch module
_LANE = 128


def _softmax_kernel(x_ref, o_ref):
    # x_ref / o_ref: (NB, C, S_TILE, 128) VMEM tiles.
    z = M * x_ref[...].astype(jnp.float32)
    # Stabilization: channel-max subtraction (C-1 elementwise maxes on the VPU).
    m = jnp.max(z, axis=1, keepdims=True)
    e = jnp.exp(z - m)                                  # EUP
    s = jnp.sum(e, axis=1, keepdims=True)               # C-1 elementwise adds
    # Approx reciprocal (EUP slot, ~2^-12 rel err) + one Newton step -> ~1e-7.
    r = pl.reciprocal(s, approx=True)
    r = r * (2.0 - s * r)
    o_ref[...] = (e * r).astype(o_ref.dtype)


def _pick_tiles(N, C, S, itemsize, target_block_bytes):
    """Pick (NB, S_TILE) so one block is ~target_block_bytes.

    Keeps 2 arrays x 2 double buffers x block well under the scoped VMEM
    defaults on every generation (v5e 16 MiB, v6e/v7x 32 MiB).
    """
    row_bytes = C * _LANE * itemsize               # bytes for one unit of S
    s_budget = max(1, target_block_bytes // row_bytes)
    if S <= s_budget:
        s_tile = S                                 # full extent: (8,128) rule OK
    else:
        s_tile = max(8, (min(S, s_budget) // 8) * 8)   # multiple of 8 sublanes
    nb = 1
    if s_tile == S:
        # Whole spatial extent fits in one tile -> pack batch elements so a
        # grid step is not dominated by the ~0.35us per-step overhead.
        nb_budget = max(1, target_block_bytes // (S * row_bytes))
        for d in range(min(N, nb_budget), 0, -1):
            if N % d == 0:
                nb = d
                break
    return nb, s_tile


def custom_softmax(x, *, target_block_bytes=2 << 20):
    """x: (N, C, H, W).  Returns softmax over the channel dim of M * x."""
    N, C, H, W = x.shape
    HW = H * W
    hw_pad = ((HW + _LANE - 1) // _LANE) * _LANE

    x2 = x.reshape(N, C, HW)
    if hw_pad != HW:
        x2 = jnp.pad(x2, ((0, 0), (0, 0), (0, hw_pad - HW)))
    S = hw_pad // _LANE
    x4 = x2.reshape(N, C, S, _LANE)

    nb, s_tile = _pick_tiles(N, C, S, x.dtype.itemsize, target_block_bytes)
    grid = (N // nb, pl.cdiv(S, s_tile))
    block = (nb, C, s_tile, _LANE)
    spec = pl.BlockSpec(block, lambda n, s: (n, 0, s, 0))

    out4 = pl.pallas_call(
        _softmax_kernel,
        out_shape=jax.ShapeDtypeStruct((N, C, S, _LANE), x.dtype),
        grid_spec=pltpu.PrefetchScalarGridSpec(
            num_scalar_prefetch=0,
            grid=grid,
            in_specs=[spec],
            out_specs=spec,
        ),
        compiler_params=pltpu.CompilerParams(
            dimension_semantics=("parallel", "parallel")),
    )(x4)

    out = out4.reshape(N, C, hw_pad)
    if hw_pad != HW:
        out = out[:, :, :HW]
    return out.reshape(N, C, H, W)


if __name__ == "__main__":
    key = jax.random.PRNGKey(0)
    x = jax.random.normal(key, (2, 4, 16, 16), dtype=jnp.float32)

    y = custom_softmax(x)
    jax.block_until_ready(y)

    # Stabilized reference: identical to the PyTorch module wherever the
    # un-stabilized exp(30*x) formula is finite.
    ref = jax.nn.softmax(M * x, axis=1)

    assert y.shape == x.shape
    assert bool(jnp.all(jnp.isfinite(y)))
    assert jnp.allclose(y, ref, atol=1e-4, rtol=1e-4)
    assert jnp.allclose(jnp.sum(y, axis=1), 1.0, atol=1e-4)

    print("KERNEL_OK")
</pallas_src>

<mosaic_0001>
module attributes {stable_mosaic.version = 11 : i64} {
  func.func @_softmax_kernel(%arg0: i32, %arg1: i32, %arg2: memref<2x4x2x128xf32, #tpu.memory_space<vmem>>, %arg3: memref<2x4x2x128xf32, #tpu.memory_space<vmem>>) attributes {dimension_semantics = [#tpu.dimension_semantics<parallel>, #tpu.dimension_semantics<parallel>], iteration_bounds = array<i64: 1, 1>, scalar_prefetch = 0 : i64, scratch_operands = 0 : i64, tpu.core_type = #tpu.core_type<tc>, window_params = [{transform_indices = @transform_0, window_bounds = array<i64: 2, 4, 2, 128>}, {transform_indices = @transform_1, window_bounds = array<i64: 2, 4, 2, 128>}]} {
    %c0 = arith.constant 0 : index
    %c0_0 = arith.constant 0 : index
    %c0_1 = arith.constant 0 : index
    %c0_2 = arith.constant 0 : index
    %0 = vector.load %arg2[%c0, %c0_0, %c0_1, %c0_2] : memref<2x4x2x128xf32, #tpu.memory_space<vmem>>, vector<2x4x2x128xf32>
    %cst = arith.constant 3.000000e+01 : f32
    %1 = vector.broadcast %cst : f32 to vector<2x4x2x128xf32>
    %2 = arith.mulf %1, %0 : vector<2x4x2x128xf32>
    %cst_3 = arith.constant dense<0xFF800000> : vector<2x2x128xf32>
    %3 = vector.multi_reduction <maximumf>, %2, %cst_3 [1] : vector<2x4x2x128xf32> to vector<2x2x128xf32>
    %4 = vector.shape_cast %3 : vector<2x2x128xf32> to vector<2x1x2x128xf32>
    %5 = vector.broadcast %4 : vector<2x1x2x128xf32> to vector<2x4x2x128xf32>
    %6 = arith.subf %2, %5 : vector<2x4x2x128xf32>
    %7 = math.exp %6 : vector<2x4x2x128xf32>
    %cst_4 = arith.constant dense<0.000000e+00> : vector<2x2x128xf32>
    %8 = vector.multi_reduction <add>, %7, %cst_4 [1] : vector<2x4x2x128xf32> to vector<2x2x128xf32>
    %9 = vector.shape_cast %8 : vector<2x2x128xf32> to vector<2x1x2x128xf32>
    %10 = tpu.reciprocal %9 {approx = true} : vector<2x1x2x128xf32> -> vector<2x1x2x128xf32>
    %11 = arith.mulf %9, %10 : vector<2x1x2x128xf32>
    %cst_5 = arith.constant 2.000000e+00 : f32
    %12 = vector.broadcast %cst_5 : f32 to vector<2x1x2x128xf32>
    %13 = arith.subf %12, %11 : vector<2x1x2x128xf32>
    %14 = arith.mulf %10, %13 : vector<2x1x2x128xf32>
    %15 = vector.broadcast %14 : vector<2x1x2x128xf32> to vector<2x4x2x128xf32>
    %16 = arith.mulf %7, %15 : vector<2x4x2x128xf32>
    %c0_6 = arith.constant 0 : index
    %c0_7 = arith.constant 0 : index
    %c0_8 = arith.constant 0 : index
    %c0_9 = arith.constant 0 : index
    %17 = vector.load %arg3[%c0_6, %c0_7, %c0_8, %c0_9] : memref<2x4x2x128xf32, #tpu.memory_space<vmem>>, vector<2x4x2x128xf32>
    tpu.vector_store %arg3[%c0_6, %c0_7, %c0_8, %c0_9], %16 {strides = array<i32>} : memref<2x4x2x128xf32, #tpu.memory_space<vmem>>, vector<2x4x2x128xf32>,
    return
  }
  func.func @transform_0(%arg0: i32, %arg1: i32) -> (i32, i32, i32, i32) {
    %c0_i32 = arith.constant 0 : i32
    %c0_i32_0 = arith.constant 0 : i32
    %c0_i32_1 = arith.constant 0 : i32
    return %arg0, %c0_i32, %arg1, %c0_i32_0 : i32, i32, i32, i32
  }
  func.func @transform_1(%arg0: i32, %arg1: i32) -> (i32, i32, i32, i32) {
    %c0_i32 = arith.constant 0 : i32
    %c0_i32_0 = arith.constant 0 : i32
    %c0_i32_1 = arith.constant 0 : i32
    return %arg0, %c0_i32, %arg1, %c0_i32_0 : i32, i32, i32, i32
  }
}

</mosaic_0001>

<llo_original>
// kernel: tpu_custom_call.1
$region0: #{tpu_custom_call.1}
  #allocation0 [shape = 'u32[]', space=smem, size = 0x4, offset = 0x4, fixed_abs, tag = 'smem constant byte address 0x4 - core index']
  #allocation1 [shape = 'u32[144,128]{1,0:T(1,128)}', space=vmem, size = 0x12000, scoped, tag = 'internal scratch']
  %s0 = inlined_call_operand.hbm [shape: f32[2,4,2,128], index: 0, kind: input, shape index: {}]
  %s1 = inlined_call_operand.hbm [shape: f32[2,4,2,128], index: 1, kind: output, shape index: {}]
  %s2 = sld [smem:[#allocation0]]
  $region18: #{tpu_custom_call.1} parent=0
    _
  %s4 = ssub.s32 1, %s2
  %s5 = scalar_select 0, %s4, %s2
  $region1: #{tpu_custom_call.1} parent=0
    #allocation2 [shape = 'u8[8192]{0}', space=vmem, size = 0x2000, scoped, tag = 'input window, operand 0, single buffered']
    #allocation3 [shape = 's32[1]{0}', space=sflag, size = 0x4, scoped, tag = 'scoped memory for tpu_custom_call.1']
    #allocation4 [shape = 's32[1]{0}', space=sflag, size = 0x4, scoped, tag = 'scoped memory for tpu_custom_call.1']
    #allocation5 [shape = 'u8[8192]{0}', space=vmem, size = 0x2000, scoped, tag = 'output window, operand 0, single buffered']
    %6 = vsyncpa [#allocation3], 0
    %7 = vsyncpa [#allocation4], 0
    // Predicated region
    $region2: #{tpu_custom_call.1} parent=1 // pred_check
      _
    $region3: #{tpu_custom_call.1} parent=1 // pred_check_branch
      %9 = sbr.rel (0) target = $region5
    $region4: #{tpu_custom_call.1} parent=1 // pred_region
      %s11 = ssub.s32 256, 256
      %12 = vsyncadd [#allocation3], %s11
      %s13 = sshll.u32 [#allocation2], 4
      %s14 = int_to_ptr.vmem [resolvable:$true] %s13
      %19 = dma.hbm_to_vmem [thread:$0]  %s0, 256, %s14, [#allocation3], 32, 32, 2
    $region5: #{tpu_custom_call.1} parent=1 // pred_fallthru
      _
    // Predicated region
    $region6: #{tpu_custom_call.1} parent=1 // pred_check
      _
    $region7: #{tpu_custom_call.1} parent=1 // pred_check_branch
      %21 = sbr.rel (0) target = $region9
    $region8: #{tpu_custom_call.1} parent=1 // pred_region
      %22 = dma.done [#allocation3], 256
    $region9: #{tpu_custom_call.1} parent=1 // pred_fallthru
      _
    %v23 = vld [vmem:[#allocation2] sm:$0x3]
    %v24 = vld [vmem:[#allocation2 + $0x2] sm:$0x3]
    %v25 = vld [vmem:[#allocation2 + $0x4] sm:$0x3]
    %v26 = vld [vmem:[#allocation2 + $0x6] sm:$0x3]
    %v27 = vld [vmem:[#allocation2 + $0x8] sm:$0x3]
    %v28 = vld [vmem:[#allocation2 + $0xa] sm:$0x3]
    %v29 = vld [vmem:[#allocation2 + $0xc] sm:$0x3]
    %v30 = vld [vmem:[#allocation2 + $0xe] sm:$0x3]
    %v31 = vmul.f32 %v23, 30.0
    %v32 = vmul.f32 %v24, 30.0
    %v33 = vmul.f32 %v25, 30.0
    %v34 = vmul.f32 %v26, 30.0
    %v35 = vmul.f32 %v27, 30.0
    %v36 = vmul.f32 %v28, 30.0
    %v37 = vmul.f32 %v29, 30.0
    %v38 = vmul.f32 %v30, 30.0
    %vm39 = vcmask 1041408
    %v40 = vsel %vm39, %v31, -inf
    %v41 = vsel %vm39, %v32, -inf
    %v42 = vsel %vm39, %v33, -inf
    %v43 = vmax.f32 %v40, %v42
    %v44 = vsel %vm39, %v34, -inf
    %v45 = vmax.f32 %v41, %v44
    %v46 = vmax.f32 %v43, %v45
    %v47 = vsel %vm39, %v35, -inf
    %v48 = vsel %vm39, %v36, -inf
    %v49 = vsel %vm39, %v37, -inf
    %v50 = vmax.f32 %v47, %v49
    %v51 = vsel %vm39, %v38, -inf
    %v52 = vmax.f32 %v48, %v51
    %v53 = vmax.f32 %v50, %v52
    %v54 = vsub.f32 %v31, %v46
    %v55 = vsub.f32 %v32, %v46
    %v56 = vsub.f32 %v33, %v46
    %v57 = vsub.f32 %v34, %v46
    %v58 = vsub.f32 %v35, %v53
    %v59 = vsub.f32 %v36, %v53
    %v60 = vsub.f32 %v37, %v53
    %v61 = vsub.f32 %v38, %v53
    %v62 = vmul.f32 %v54, 1.442695
    %v63 = vpow.pop %v62
    %v64 = vmul.f32 %v55, 1.442695
    %v65 = vpow.pop %v64
    %v66 = vmul.f32 %v56, 1.442695
    %v67 = vpow.pop %v66
    %v68 = vmul.f32 %v57, 1.442695
    %v69 = vpow.pop %v68
    %v70 = vmul.f32 %v58, 1.442695
    %v71 = vpow.pop %v70
    %v72 = vmul.f32 %v59, 1.442695
    %v73 = vpow.pop %v72
    %v74 = vmul.f32 %v60, 1.442695
    %v75 = vpow.pop %v74
    %v76 = vmul.f32 %v61, 1.442695
    %v77 = vpow.pop %v76
    %v78 = vsel %vm39, %v63, 0.0
    %v79 = vsel %vm39, %v65, 0.0
    %v80 = vadd.f32 %v78, %v79
    %v81 = vsel %vm39, %v67, 0.0
    %v82 = vadd.f32 %v80, %v81
    %v83 = vsel %vm39, %v69, 0.0
    %v84 = vadd.f32 %v82, %v83
    %v85 = vsel %vm39, %v71, 0.0
    %v86 = vsel %vm39, %v73, 0.0
    %v87 = vadd.f32 %v85, %v86
    %v88 = vsel %vm39, %v75, 0.0
    %v89 = vadd.f32 %v87, %v88
    %v90 = vsel %vm39, %v77, 0.0
    %v91 = vadd.f32 %v89, %v90
    %v92 = vrcp.pop %v84
    %v93 = vrcp.pop %v91
    %v94 = vmul.f32 %v84, %v92
    %v95 = vmul.f32 %v91, %v93
    %v96 = vsub.f32 2.0, %v94
    %v97 = vsub.f32 2.0, %v95
    %v98 = vmul.f32 %v92, %v96
    %v99 = vmul.f32 %v93, %v97
    %v100 = vmul.f32 %v63, %v98
    %v101 = vmul.f32 %v65, %v98
    %v102 = vmul.f32 %v67, %v98
    %v103 = vmul.f32 %v69, %v98
    %v104 = vmul.f32 %v71, %v99
    %v105 = vmul.f32 %v73, %v99
    %v106 = vmul.f32 %v75, %v99
    %v107 = vmul.f32 %v77, %v99
    %108 = vst [vmem:[#allocation5] sm:$0x3] %v100
    %109 = vst [vmem:[#allocation5 + $0x2] sm:$0x3] %v101
    %110 = vst [vmem:[#allocation5 + $0x4] sm:$0x3] %v102
    %111 = vst [vmem:[#allocation5 + $0x6] sm:$0x3] %v103
    %112 = vst [vmem:[#allocation5 + $0x8] sm:$0x3] %v104
    %113 = vst [vmem:[#allocation5 + $0xa] sm:$0x3] %v105
    %114 = vst [vmem:[#allocation5 + $0xc] sm:$0x3] %v106
    %115 = vst [vmem:[#allocation5 + $0xe] sm:$0x3] %v107
    // Predicated region
    $region10: #{tpu_custom_call.1} parent=1 // pred_check
      _
    $region11: #{tpu_custom_call.1} parent=1 // pred_check_branch
      %117 = sbr.rel (0) target = $region13
    $region12: #{tpu_custom_call.1} parent=1 // pred_region
      %s119 = ssub.s32 256, 256
      %120 = vsyncadd [#allocation4], %s119
      %s121 = sshll.u32 [#allocation5], 4
      %s122 = int_to_ptr.vmem [resolvable:$true] %s121
      %127 = dma.vmem_to_hbm [thread:$0]  %s122, 256, %s1, [#allocation4], 32, 32, 2
    $region13: #{tpu_custom_call.1} parent=1 // pred_fallthru
      _
    // Predicated region
    $region14: #{tpu_custom_call.1} parent=1 // pred_check
      _
    $region15: #{tpu_custom_call.1} parent=1 // pred_check_branch
      %129 = sbr.rel (0) target = $region17
    $region16: #{tpu_custom_call.1} parent=1 // pred_region
      %130 = dma.done [#allocation4], 256
    $region17: #{tpu_custom_call.1} parent=1 // pred_fallthru
      _
    %131 = vsyncpa [#allocation3], 1
    %132 = vsyncpa [#allocation4], 1

</llo_original>
